<compile_context>
chip_gen: v7x
topology: tpu7x:2x2x1
jax: 0.10.0
libtpu: 0.0.40
codegen_flags: <defaults>
</compile_context>

<pallas_src>
import functools

import jax
import jax.numpy as jnp
from jax.experimental import pallas as pl
from jax.experimental.pallas import tpu as pltpu


def _infnorm_partial_kernel(mask_ref, a_ref, b_ref, out_ref, *,
                            group_w, lanes, tile_r, valid_rows):
    """Partial sum of row-wise infinity norms for one (tile_r, lanes) block.

    mask_ref: (1, lanes) int32, 1 at segment-start lanes (lane % group_w == 0).
    a_ref/b_ref: (tile_r, lanes) lane-dense tiles; each row packs lanes//group_w
      original rows of width group_w.
    out_ref: (8, 128) f32 slab; the block's scalar partial sum is splatted into it
      (the wrapper reads element [0, 0] of each slab).
    """
    d = jnp.abs(a_ref[...] - b_ref[...])            # (tile_r, lanes), input dtype
    need_row_mask = (valid_rows % tile_r) != 0      # static Python bool

    if lanes == group_w:
        # One original row per kernel row: plain lane-axis max.
        m = jnp.max(d, axis=1, keepdims=True).astype(jnp.float32)    # (tile_r, 1)
        if need_row_mask:
            row = (jax.lax.broadcasted_iota(jnp.int32, (tile_r, 1), 0)
                   + pl.program_id(0) * tile_r)
            m = jnp.where(row < valid_rows, m, 0.0)
        total = jnp.sum(m)
    else:
        # Segmented max over each group_w-wide lane segment via a roll tree.
        # pltpu.roll follows jnp.roll semantics, so roll(d, lanes - k) places lane
        # (i + k) mod lanes at position i; after coverage reaches group_w, each
        # segment-start lane holds the max over its own group_w-lane segment.
        cov = 1
        while cov < group_w:
            k = min(cov, group_w - cov)
            d = jnp.maximum(d, pltpu.roll(d, shift=lanes - k, axis=1))
            cov += k
        keep = mask_ref[...] != 0                   # (1, lanes) segment-start mask
        if need_row_mask:
            row = (jax.lax.broadcasted_iota(jnp.int32, (tile_r, lanes), 0)
                   + pl.program_id(0) * tile_r)
            keep = jnp.logical_and(keep, row < valid_rows)
        vals = jnp.where(keep, d, jnp.zeros_like(d)).astype(jnp.float32)
        total = jnp.sum(vals)                       # one dense f32 reduce per block

    out_ref[...] = jnp.full((8, 128), total, dtype=jnp.float32)


def _vmem_capacity_bytes():
    try:
        info = pltpu.get_tpu_info()
        for name in ("vmem_capacity_bytes", "vmem_size_bytes", "vmem_bytes"):
            cap = getattr(info, name, None)
            if cap:
                return int(cap)
    except Exception:
        pass
    return 64 * 1024 * 1024        # conservative: assume v7x-sized VMEM


def _choose_packing(n_rows, w, max_lanes=512):
    """Pick (G, L): G rows packed per L-lane kernel row using only a free reshape."""
    if w >= 128 and w % 128 == 0:
        return 1, w                                  # already lane dense
    for lanes in range(128, max_lanes + 1, 128):
        if lanes % w == 0 and n_rows % (lanes // w) == 0:
            return lanes // w, lanes                 # fully lane-dense packing
    return 1, w                                      # fallback: lane-padded VMEM rows


def infityloss(inputs, labels):
    assert inputs.shape == labels.shape and inputs.ndim == 4
    B, C, H, W = inputs.shape
    N = B * C * H

    # Compute dtype: f32 or bf16 (native); anything else -> f32. bf16 stays bf16
    # to halve HBM traffic (the binding resource).
    if inputs.dtype not in (jnp.float32, jnp.bfloat16):
        inputs = inputs.astype(jnp.float32)
    labels = labels.astype(inputs.dtype)
    dtype = inputs.dtype
    itemsize = jnp.dtype(dtype).itemsize
    sub = 8 if itemsize == 4 else 16                 # sublane granularity f32 / bf16

    G, L = _choose_packing(N, W)
    rows = N // G                                    # exact: N % G == 0 by construction

    # Per-generation VMEM / block sizing.
    vmem_cap = _vmem_capacity_bytes()
    if vmem_cap >= 100 * 1024 * 1024:                # v5e / v6e: 128 MiB VMEM
        target_block_bytes = 8 * 1024 * 1024
        vmem_limit = 80 * 1024 * 1024
    else:                                            # v7x: 64 MiB VMEM -> headroom
        target_block_bytes = 4 * 1024 * 1024
        vmem_limit = min(48 * 1024 * 1024, (vmem_cap * 3) // 4)

    lanes_vmem = -(-L // 128) * 128                  # VMEM lane padding (fallback path)
    row_bytes = lanes_vmem * itemsize
    if rows < sub:
        tile_r = rows                                # full-extent block is always legal
    else:
        tile_r = max(sub, min((target_block_bytes // row_bytes) // sub * sub,
                              (rows // sub) * sub))
    num_tiles = -(-rows // tile_r)

    # Free, contiguous reshape (no HBM copy, no pad): (B,C,H,W) -> (rows, L).
    a2 = inputs.reshape(rows, L)
    b2 = labels.reshape(rows, L)

    # Segment-start lane mask, built once on the host side (tiny).
    lane = jnp.arange(L, dtype=jnp.int32)
    seg_mask = ((lane % W) == 0).astype(jnp.int32).reshape(1, L)

    kernel = functools.partial(_infnorm_partial_kernel,
                               group_w=W, lanes=L, tile_r=tile_r, valid_rows=rows)

    cost = pl.CostEstimate(
        flops=3 * N * W,                              # sub + abs + max-compare
        transcendentals=0,
        bytes_accessed=2 * N * W * itemsize + num_tiles * 8 * 128 * 4,
    )

    partials = pl.pallas_call(
        kernel,
        out_shape=jax.ShapeDtypeStruct((num_tiles * 8, 128), jnp.float32),
        grid_spec=pltpu.PrefetchScalarGridSpec(
            num_scalar_prefetch=0,
            grid=(num_tiles,),
            in_specs=[
                pl.BlockSpec((1, L), lambda i: (0, 0)),          # segment-start mask
                pl.BlockSpec((tile_r, L), lambda i: (i, 0)),
                pl.BlockSpec((tile_r, L), lambda i: (i, 0)),
            ],
            out_specs=pl.BlockSpec((8, 128), lambda i: (i, 0)),
        ),
        compiler_params=pltpu.CompilerParams(
            # TODO(synk): on v7x, verify the single "parallel" axis is sharded
            # across both TensorCores; if not, add a leading size-2 CORE_PARALLEL
            # axis (or pl.core_map) and split the row range explicitly.
            dimension_semantics=("parallel",),
            vmem_limit_bytes=vmem_limit,
        ),
        cost_estimate=cost,
    )(seg_mask, a2, b2)

    total = jnp.sum(partials[0::8, 0])                # one scalar per grid block
    return (total / jnp.float32(N)).astype(jnp.float32)


def _reference(inputs, labels):
    return jnp.mean(jnp.max(jnp.abs(inputs.astype(jnp.float32)
                                    - labels.astype(jnp.float32)), axis=3))


if __name__ == "__main__":
    key = jax.random.PRNGKey(0)

    # Primary shape from the module spec: [B, C, H, W].
    k1, k2, k3, k4, k5, k6 = jax.random.split(key, 6)
    shape = (2, 4, 16, 16)
    inputs = jax.random.normal(k1, shape, dtype=jnp.float32)
    labels = jax.random.normal(k2, shape, dtype=jnp.float32)
    out = jax.block_until_ready(infityloss(inputs, labels))
    ref = _reference(inputs, labels)
    assert jnp.allclose(out, ref, rtol=1e-5, atol=1e-6), (out, ref)

    # Ragged packed-row count: exercises the roll-tree path + in-kernel row mask.
    shape2 = (2, 4, 15, 16)
    i2 = jax.random.normal(k3, shape2, dtype=jnp.float32)
    l2 = jax.random.normal(k4, shape2, dtype=jnp.float32)
    out2 = jax.block_until_ready(infityloss(i2, l2))
    ref2 = _reference(i2, l2)
    assert jnp.allclose(out2, ref2, rtol=1e-5, atol=1e-6), (out2, ref2)

    # Row count with no lane-dense packing divisor: exercises the G == 1 fallback.
    shape3 = (2, 3, 10, 16)
    i3 = jax.random.normal(k5, shape3, dtype=jnp.float32)
    l3 = jax.random.normal(k6, shape3, dtype=jnp.float32)
    out3 = jax.block_until_ready(infityloss(i3, l3))
    ref3 = _reference(i3, l3)
    assert jnp.allclose(out3, ref3, rtol=1e-5, atol=1e-6), (out3, ref3)

    print("KERNEL_OK")
</pallas_src>

<mosaic_0001>
module attributes {stable_mosaic.version = 11 : i64} {
  func.func @_infnorm_partial_kernel(%arg0: i32, %arg1: memref<1x128xi32, #tpu.memory_space<vmem>>, %arg2: memref<16x128xf32, #tpu.memory_space<vmem>>, %arg3: memref<16x128xf32, #tpu.memory_space<vmem>>, %arg4: memref<8x128xf32, #tpu.memory_space<vmem>>) attributes {dimension_semantics = [#tpu.dimension_semantics<parallel>], iteration_bounds = array<i64: 1>, scalar_prefetch = 0 : i64, scratch_operands = 0 : i64, tpu.core_type = #tpu.core_type<tc>, window_params = [{pipeline_mode = #tpu.pipeline_mode<synchronous>, transform_indices = @transform_0, window_bounds = array<i64: 1, 128>}, {transform_indices = @transform_1, window_bounds = array<i64: 16, 128>}, {transform_indices = @transform_2, window_bounds = array<i64: 16, 128>}, {transform_indices = @transform_3, window_bounds = array<i64: 8, 128>}]} {
    %c0 = arith.constant 0 : index
    %c0_0 = arith.constant 0 : index
    %0 = vector.load %arg2[%c0, %c0_0] : memref<16x128xf32, #tpu.memory_space<vmem>>, vector<16x128xf32>
    %c0_1 = arith.constant 0 : index
    %c0_2 = arith.constant 0 : index
    %1 = vector.load %arg3[%c0_1, %c0_2] : memref<16x128xf32, #tpu.memory_space<vmem>>, vector<16x128xf32>
    %2 = arith.subf %0, %1 : vector<16x128xf32>
    %3 = math.absf %2 : vector<16x128xf32>
    %c127_i32 = arith.constant 127 : i32
    %4 = tpu.dynamic_rotate %3 by %c127_i32 dim 1 : vector<16x128xf32>, i32 -> vector<16x128xf32>
    %5 = arith.maximumf %3, %4 : vector<16x128xf32>
    %c126_i32 = arith.constant 126 : i32
    %6 = tpu.dynamic_rotate %5 by %c126_i32 dim 1 : vector<16x128xf32>, i32 -> vector<16x128xf32>
    %7 = arith.maximumf %5, %6 : vector<16x128xf32>
    %c124_i32 = arith.constant 124 : i32
    %8 = tpu.dynamic_rotate %7 by %c124_i32 dim 1 : vector<16x128xf32>, i32 -> vector<16x128xf32>
    %9 = arith.maximumf %7, %8 : vector<16x128xf32>
    %c120_i32 = arith.constant 120 : i32
    %10 = tpu.dynamic_rotate %9 by %c120_i32 dim 1 : vector<16x128xf32>, i32 -> vector<16x128xf32>
    %11 = arith.maximumf %9, %10 : vector<16x128xf32>
    %c0_3 = arith.constant 0 : index
    %c0_4 = arith.constant 0 : index
    %12 = vector.load %arg1[%c0_3, %c0_4] : memref<1x128xi32, #tpu.memory_space<vmem>>, vector<1x128xi32>
    %c0_i32 = arith.constant 0 : i32
    %13 = vector.broadcast %c0_i32 : i32 to vector<1x128xi32>
    %14 = arith.cmpi ne, %12, %13 : vector<1x128xi32>
    %cst = arith.constant 0.000000e+00 : f32
    %15 = vector.broadcast %cst : f32 to vector<16x128xf32>
    %16 = vector.shape_cast %14 : vector<1x128xi1> to vector<1x128xi1>
    %17 = vector.broadcast %16 : vector<1x128xi1> to vector<16x128xi1>
    %18 = arith.select %17, %11, %15 : vector<16x128xi1>, vector<16x128xf32>
    %19 = vector.shape_cast %18 : vector<16x128xf32> to vector<1x16x128xf32>
    %cst_5 = arith.constant dense<0.000000e+00> : vector<1xf32>
    %20 = vector.multi_reduction <add>, %19, %cst_5 [1, 2] : vector<1x16x128xf32> to vector<1xf32>
    %21 = vector.shape_cast %20 : vector<1xf32> to vector<1x1x1xf32>
    %22 = vector.extract %21[0, 0, 0] : f32 from vector<1x1x1xf32>
    %23 = vector.broadcast %22 : f32 to vector<8x128xf32>
    %c0_6 = arith.constant 0 : index
    %c0_7 = arith.constant 0 : index
    %24 = vector.load %arg4[%c0_6, %c0_7] : memref<8x128xf32, #tpu.memory_space<vmem>>, vector<8x128xf32>
    tpu.vector_store %arg4[%c0_6, %c0_7], %23 {strides = array<i32>} : memref<8x128xf32, #tpu.memory_space<vmem>>, vector<8x128xf32>,
    return
  }
  func.func @transform_0(%arg0: i32) -> (i32, i32) {
    %c0_i32 = arith.constant 0 : i32
    %c0_i32_0 = arith.constant 0 : i32
    %c0_i32_1 = arith.constant 0 : i32
    return %c0_i32, %c0_i32_0 : i32, i32
  }
  func.func @transform_1(%arg0: i32) -> (i32, i32) {
    %c0_i32 = arith.constant 0 : i32
    %c0_i32_0 = arith.constant 0 : i32
    return %arg0, %c0_i32 : i32, i32
  }
  func.func @transform_2(%arg0: i32) -> (i32, i32) {
    %c0_i32 = arith.constant 0 : i32
    %c0_i32_0 = arith.constant 0 : i32
    return %arg0, %c0_i32 : i32, i32
  }
  func.func @transform_3(%arg0: i32) -> (i32, i32) {
    %c0_i32 = arith.constant 0 : i32
    %c0_i32_0 = arith.constant 0 : i32
    return %arg0, %c0_i32 : i32, i32
  }
}

</mosaic_0001>

<llo_original>
// kernel: tpu_custom_call.1
$region0: #{tpu_custom_call.1}
  #allocation0 [shape = 'u32[]', space=smem, size = 0x4, offset = 0x4, fixed_abs, tag = 'smem constant byte address 0x4 - core index']
  #allocation1 [shape = 'u32[144,128]{1,0:T(1,128)}', space=vmem, size = 0x12000, scoped, tag = 'internal scratch']
  %s0 = inlined_call_operand.hbm [shape: s32[1,128], index: 0, kind: input, shape index: {}]
  %s1 = inlined_call_operand.hbm [shape: f32[16,128], index: 1, kind: input, shape index: {}]
  %s2 = inlined_call_operand.hbm [shape: f32[16,128], index: 2, kind: input, shape index: {}]
  %s3 = inlined_call_operand.hbm [shape: f32[8,128], index: 3, kind: output, shape index: {}]
  %s4 = sld [smem:[#allocation0]]
  $region34: #{tpu_custom_call.1} parent=0
    _
  %s6 = ssub.s32 1, %s4
  %s7 = scalar_select 0, %s6, %s4
  $region1: #{tpu_custom_call.1} parent=0
    #allocation2 [shape = 'u8[512]{0}', space=vmem, size = 0x400, scoped, tag = 'input window, operand 0, single buffered']
    #allocation3 [shape = 's32[1]{0}', space=sflag, size = 0x4, scoped, tag = 'scoped memory for tpu_custom_call.1']
    #allocation4 [shape = 's32[1]{0}', space=sflag, size = 0x4, scoped, tag = 'scoped memory for tpu_custom_call.1']
    #allocation5 [shape = 'u8[8192]{0}', space=vmem, size = 0x2000, scoped, tag = 'input window, operand 1, single buffered']
    #allocation6 [shape = 's32[1]{0}', space=sflag, size = 0x4, scoped, tag = 'scoped memory for tpu_custom_call.1']
    #allocation7 [shape = 'u8[8192]{0}', space=vmem, size = 0x2000, scoped, tag = 'input window, operand 2, single buffered']
    #allocation8 [shape = 'u8[4096]{0}', space=vmem, size = 0x1000, scoped, tag = 'output window, operand 0, single buffered']
    %8 = vsyncpa [#allocation3], 0
    %9 = vsyncpa [#allocation6], 0
    %10 = vsyncpa [#allocation4], 0
    // Predicated region
    $region2: #{tpu_custom_call.1} parent=1 // pred_check
      _
    $region3: #{tpu_custom_call.1} parent=1 // pred_check_branch
      %12 = sbr.rel (0) target = $region5
    $region4: #{tpu_custom_call.1} parent=1 // pred_region
      %s14 = ssub.s32 16, 16
      %15 = vsyncadd [#allocation3], %s14
      %s17 = sshll.u32 [#allocation2], 4
      %s18 = int_to_ptr.vmem [resolvable:$true] %s17
      %20 = dma.hbm_to_vmem [thread:$0]  %s0, 16, %s18, [#allocation3]
    $region5: #{tpu_custom_call.1} parent=1 // pred_fallthru
      _
    // Predicated region
    $region6: #{tpu_custom_call.1} parent=1 // pred_check
      _
    $region7: #{tpu_custom_call.1} parent=1 // pred_check_branch
      %22 = sbr.rel (0) target = $region9
    $region8: #{tpu_custom_call.1} parent=1 // pred_region
      %s24 = ssub.s32 256, 256
      %25 = vsyncadd [#allocation6], %s24
      %s26 = sshll.u32 [#allocation5], 4
      %s27 = int_to_ptr.vmem [resolvable:$true] %s26
      %32 = dma.hbm_to_vmem [thread:$0]  %s1, 256, %s27, [#allocation6], 128, 128, 8
    $region9: #{tpu_custom_call.1} parent=1 // pred_fallthru
      _
    // Predicated region
    $region10: #{tpu_custom_call.1} parent=1 // pred_check
      _
    $region11: #{tpu_custom_call.1} parent=1 // pred_check_branch
      %34 = sbr.rel (0) target = $region13
    $region12: #{tpu_custom_call.1} parent=1 // pred_region
      %s36 = ssub.s32 256, 256
      %37 = vsyncadd [#allocation6], %s36
      %s38 = sshll.u32 [#allocation7], 4
      %s39 = int_to_ptr.vmem [resolvable:$true] %s38
      %44 = dma.hbm_to_vmem [thread:$0]  %s2, 256, %s39, [#allocation6], 128, 128, 8
    $region13: #{tpu_custom_call.1} parent=1 // pred_fallthru
      _
    // Predicated region
    $region14: #{tpu_custom_call.1} parent=1 // pred_check
      _
    $region15: #{tpu_custom_call.1} parent=1 // pred_check_branch
      %46 = sbr.rel (0) target = $region17
    $region16: #{tpu_custom_call.1} parent=1 // pred_region
      %47 = dma.done [#allocation3], 16
    $region17: #{tpu_custom_call.1} parent=1 // pred_fallthru
      _
    // Predicated region
    $region18: #{tpu_custom_call.1} parent=1 // pred_check
      _
    $region19: #{tpu_custom_call.1} parent=1 // pred_check_branch
      %49 = sbr.rel (0) target = $region21
    $region20: #{tpu_custom_call.1} parent=1 // pred_region
      %50 = dma.done [#allocation6], 256
    $region21: #{tpu_custom_call.1} parent=1 // pred_fallthru
      _
    // Predicated region
    $region22: #{tpu_custom_call.1} parent=1 // pred_check
      _
    $region23: #{tpu_custom_call.1} parent=1 // pred_check_branch
      %52 = sbr.rel (0) target = $region25
    $region24: #{tpu_custom_call.1} parent=1 // pred_region
      %53 = dma.done [#allocation6], 256
    $region25: #{tpu_custom_call.1} parent=1 // pred_fallthru
      _
    %v54 = vld [vmem:[#allocation5] sm:$0xff]
    %v55 = vld [vmem:[#allocation5 + $0x8] sm:$0xff]
    %v56 = vld [vmem:[#allocation7] sm:$0xff]
    %v57 = vld [vmem:[#allocation7 + $0x8] sm:$0xff]
    %v58 = vsub.f32 %v54, %v56
    %v59 = vsub.f32 %v55, %v57
    %v60 = vand.u32 2147483647, %v58
    %v61 = vand.u32 2147483647, %v59
    %62 = vrot.lane.b32.xlu0 %v60, 127
    %v63 = vpop.permute.xlu0 %62
    %64 = vrot.lane.b32.xlu0 %v61, 127
    %v65 = vpop.permute.xlu0 %64
    %v66 = vmax.f32 %v60, %v63
    %v67 = vmax.f32 %v61, %v65
    %68 = vrot.lane.b32.xlu0 %v66, 126
    %v69 = vpop.permute.xlu0 %68
    %70 = vrot.lane.b32.xlu0 %v67, 126
    %v71 = vpop.permute.xlu0 %70
    %v72 = vmax.f32 %v66, %v69
    %v73 = vmax.f32 %v67, %v71
    %74 = vrot.lane.b32.xlu0 %v72, 124
    %v75 = vpop.permute.xlu0 %74
    %76 = vrot.lane.b32.xlu0 %v73, 124
    %v77 = vpop.permute.xlu0 %76
    %v78 = vmax.f32 %v72, %v75
    %v79 = vmax.f32 %v73, %v77
    %80 = vrot.lane.b32.xlu0 %v78, 120
    %v81 = vpop.permute.xlu0 %80
    %82 = vrot.lane.b32.xlu0 %v79, 120
    %v83 = vpop.permute.xlu0 %82
    %v84 = vmax.f32 %v78, %v81
    %v85 = vmax.f32 %v79, %v83
    %v86 = vld [vmem:[#allocation2] sm:$0x1]
    %vm87 = vcmp.ne.s32.totalorder %v86, 0
    %v88 = vsel %vm87, 1, 0
    %v89 = vlaneseq
    %v90 = vshrl.u32 %v89, 7
    %v91 = vsub.s32 0, %v90
    %v92 = vrot.slane %v88, %v91
    %vm93 = vcmp.eq.s32.totalorder %v92, 1
    %v94 = vsel %vm93, %v84, 0.0
    %v95 = vsel %vm93, %v85, 0.0
    %v96 = vadd.f32 %v94, %v95
    %97 = vadd.xlane.f32.xlu0 %v96
    %v98 = vpop.xlane.xlu0 %97
    %v99 = vrot.slane %v98, 4
    %v100 = vadd.f32 %v98, %v99
    %v101 = vrot.slane %v100, 2
    %v102 = vadd.f32 %v100, %v101
    %v103 = vrot.slane %v102, 1
    %v104 = vadd.f32 %v102, %v103
    %s105 = vtos %v104
    %v106 = vstv %s105
    %107 = vst [vmem:[#allocation8] sm:$0xff] %v106
    // Predicated region
    $region26: #{tpu_custom_call.1} parent=1 // pred_check
      _
    $region27: #{tpu_custom_call.1} parent=1 // pred_check_branch
      %109 = sbr.rel (0) target = $region29
    $region28: #{tpu_custom_call.1} parent=1 // pred_region
      %s111 = ssub.s32 128, 128
      %112 = vsyncadd [#allocation4], %s111
      %s114 = sshll.u32 [#allocation8], 4
      %s115 = int_to_ptr.vmem [resolvable:$true] %s114
      %117 = dma.vmem_to_hbm [thread:$0]  %s115, 128, %s3, [#allocation4]
    $region29: #{tpu_custom_call.1} parent=1 // pred_fallthru
      _
    // Predicated region
    $region30: #{tpu_custom_call.1} parent=1 // pred_check
      _
    $region31: #{tpu_custom_call.1} parent=1 // pred_check_branch
      %119 = sbr.rel (0) target = $region33
    $region32: #{tpu_custom_call.1} parent=1 // pred_region
      %120 = dma.done [#allocation4], 128
    $region33: #{tpu_custom_call.1} parent=1 // pred_fallthru
      _
    %121 = vsyncpa [#allocation3], 1
    %122 = vsyncpa [#allocation6], 1
    %123 = vsyncpa [#allocation4], 1

</llo_original>
